<compile_context>
chip_gen: v7x
topology: tpu7x:2x2x1
jax: 0.10.0
libtpu: 0.0.40
codegen_flags: <defaults>
</compile_context>

<pallas_src>
import math

import jax
import jax.numpy as jnp
from jax.experimental import pallas as pl
from jax.experimental.pallas import tpu as pltpu

_LANE = 128


def _round_up(x, m):
    return ((x + m - 1) // m) * m


def _pad2d(x, rows, cols):
    r, c = x.shape
    return jnp.pad(x, ((0, rows - r), (0, cols - c)))


def actor_mlp_kernel(x_ref, w1_ref, b1_ref, w2_ref, b2_ref, w3_ref, b3_ref,
                     o_ref):
    """Fused 3-layer MLP: ReLU, ReLU, Tanh. All operands resident in VMEM.

    Hidden / output feature dims are padded to multiples of 128 (lane-dense),
    so the bias adds, ReLUs, tanh and the output store are full-vreg ops.
    """
    x = x_ref[...]

    h = jnp.dot(x, w1_ref[...], preferred_element_type=jnp.float32)
    h = jnp.maximum(h + b1_ref[...], 0.0)                 # ReLU

    h = jnp.dot(h, w2_ref[...], preferred_element_type=jnp.float32)
    h = jnp.maximum(h + b2_ref[...], 0.0)                 # ReLU

    h = jnp.dot(h, w3_ref[...], preferred_element_type=jnp.float32)
    o_ref[...] = jnp.tanh(h + b3_ref[...]).astype(o_ref.dtype)   # Tanh (EUP)


def actor_forward(s, params, *, block_b=512):
    """Runs the fused actor MLP. `s` is [B, input_size] float32.

    Tiles over the batch dimension only; weights/biases are zero-padded to
    lane-dense widths (multiples of 128) once in the wrapper (they are tiny)
    and loaded whole into VMEM.  No padding/copy of the activation tensor.
    """
    (w1, b1), (w2, b2), (w3, b3) = params
    B, in_dim = s.shape
    h1, h2 = w1.shape[1], w2.shape[1]
    out_dim = w3.shape[1]

    h1p = _round_up(h1, _LANE)
    h2p = _round_up(h2, _LANE)
    outp = _round_up(out_dim, _LANE)

    # Zero-pad weights/biases to lane-dense widths (static, negligible cost).
    # Padded hidden lanes stay exactly 0 through bias-add + ReLU, and padded
    # output lanes are tanh(0) = 0, so results for real columns are unchanged.
    w1p = _pad2d(w1, in_dim, h1p)
    b1p = _pad2d(b1.reshape(1, -1), 1, h1p)
    w2p = _pad2d(w2, h1p, h2p)
    b2p = _pad2d(b2.reshape(1, -1), 1, h2p)
    w3p = _pad2d(w3, h2p, outp)
    b3p = _pad2d(b3.reshape(1, -1), 1, outp)

    # Batch tile: big enough to amortize per-step overhead, clamped so that a
    # small batch is handled as a single full-array tile (no wrapper padding).
    if B < block_b:
        block_b = B          # block == full array dim is always legal
    grid = (pl.cdiv(B, block_b),)

    full = lambda shape: pl.BlockSpec(shape, lambda i: (0, 0))

    cost = pl.CostEstimate(
        flops=2 * B * (in_dim * h1p + h1p * h2p + h2p * outp),
        transcendentals=B * outp,
        bytes_accessed=4 * (s.size + B * outp
                            + w1p.size + b1p.size
                            + w2p.size + b2p.size
                            + w3p.size + b3p.size),
    )

    out = pl.pallas_call(
        actor_mlp_kernel,
        out_shape=jax.ShapeDtypeStruct((B, outp), jnp.float32),
        grid_spec=pltpu.PrefetchScalarGridSpec(
            num_scalar_prefetch=0,
            grid=grid,
            in_specs=[
                pl.BlockSpec((block_b, in_dim), lambda i: (i, 0)),  # x tile
                full((in_dim, h1p)), full((1, h1p)),                # layer 1
                full((h1p, h2p)), full((1, h2p)),                   # layer 2
                full((h2p, outp)), full((1, outp)),                 # layer 3
            ],
            out_specs=pl.BlockSpec((block_b, outp), lambda i: (i, 0)),
        ),
        compiler_params=pltpu.CompilerParams(
            dimension_semantics=("parallel",)),
        cost_estimate=cost,
    )(s, w1p, b1p, w2p, b2p, w3p, b3p)

    return out[:, :out_dim]


def init_linear(key, fan_in, fan_out):
    """Deterministic PyTorch-style uniform init U(-1/sqrt(fan_in), 1/sqrt(fan_in))."""
    kw, kb = jax.random.split(key)
    bound = 1.0 / math.sqrt(fan_in)
    w = jax.random.uniform(kw, (fan_in, fan_out), jnp.float32, -bound, bound)
    b = jax.random.uniform(kb, (1, fan_out), jnp.float32, -bound, bound)
    return w, b


def reference_forward(s, params):
    """Plain-JAX reference of the same MLP (ReLU, ReLU, Tanh)."""
    (w1, b1), (w2, b2), (w3, b3) = params
    h = jnp.maximum(s @ w1 + b1, 0.0)
    h = jnp.maximum(h @ w2 + b2, 0.0)
    return jnp.tanh(h @ w3 + b3)


if __name__ == "__main__":
    # Small shapes implied by the module: state vector in, action vector out.
    batch = 64
    input_size = 16
    hidden_sizes = (32, 32)
    output_size = 4

    key = jax.random.PRNGKey(0)
    k_in, k1, k2, k3 = jax.random.split(key, 4)

    s = jax.random.normal(k_in, (batch, input_size), jnp.float32)
    params = (
        init_linear(k1, input_size, hidden_sizes[0]),
        init_linear(k2, hidden_sizes[0], hidden_sizes[1]),
        init_linear(k3, hidden_sizes[1], output_size),
    )

    # Use a small batch tile here so the grid has several steps (exercises the
    # batch tiling / megacore-parallel path); default block_b=512 for real use.
    a = actor_forward(s, params, block_b=16)
    a = jax.block_until_ready(a)

    a_ref = reference_forward(s, params)
    assert a.shape == (batch, output_size)
    assert jnp.allclose(a, a_ref, atol=1e-5, rtol=1e-5), "mismatch vs reference"

    print("KERNEL_OK")
</pallas_src>

<mosaic_0001>
module attributes {stable_mosaic.version = 11 : i64} {
  func.func @actor_mlp_kernel(%arg0: i32, %arg1: memref<16x16xf32, #tpu.memory_space<vmem>>, %arg2: memref<16x128xf32, #tpu.memory_space<vmem>>, %arg3: memref<1x128xf32, #tpu.memory_space<vmem>>, %arg4: memref<128x128xf32, #tpu.memory_space<vmem>>, %arg5: memref<1x128xf32, #tpu.memory_space<vmem>>, %arg6: memref<128x128xf32, #tpu.memory_space<vmem>>, %arg7: memref<1x128xf32, #tpu.memory_space<vmem>>, %arg8: memref<16x128xf32, #tpu.memory_space<vmem>>) attributes {dimension_semantics = [#tpu.dimension_semantics<parallel>], iteration_bounds = array<i64: 4>, scalar_prefetch = 0 : i64, scratch_operands = 0 : i64, tpu.core_type = #tpu.core_type<tc>, window_params = [{transform_indices = @transform_0, window_bounds = array<i64: 16, 16>}, {pipeline_mode = #tpu.pipeline_mode<synchronous>, transform_indices = @transform_1, window_bounds = array<i64: 16, 128>}, {pipeline_mode = #tpu.pipeline_mode<synchronous>, transform_indices = @transform_2, window_bounds = array<i64: 1, 128>}, {pipeline_mode = #tpu.pipeline_mode<synchronous>, transform_indices = @transform_3, window_bounds = array<i64: 128, 128>}, {pipeline_mode = #tpu.pipeline_mode<synchronous>, transform_indices = @transform_4, window_bounds = array<i64: 1, 128>}, {pipeline_mode = #tpu.pipeline_mode<synchronous>, transform_indices = @transform_5, window_bounds = array<i64: 128, 128>}, {pipeline_mode = #tpu.pipeline_mode<synchronous>, transform_indices = @transform_6, window_bounds = array<i64: 1, 128>}, {transform_indices = @transform_7, window_bounds = array<i64: 16, 128>}]} {
    %c0 = arith.constant 0 : index
    %c0_0 = arith.constant 0 : index
    %0 = vector.load %arg1[%c0, %c0_0] : memref<16x16xf32, #tpu.memory_space<vmem>>, vector<16x16xf32>
    %c0_1 = arith.constant 0 : index
    %c0_2 = arith.constant 0 : index
    %1 = vector.load %arg2[%c0_1, %c0_2] : memref<16x128xf32, #tpu.memory_space<vmem>>, vector<16x128xf32>
    %cst = arith.constant dense<0.000000e+00> : vector<16x128xf32>
    %2 = tpu.matmul %0, %1, %cst {dimension_numbers = #tpu.dot_dimension_numbers<[1], [0], [0], [1], [0, 0, 1, 1], [], []>} : vector<16x16xf32>, vector<16x128xf32>, vector<16x128xf32> -> vector<16x128xf32>
    %c0_3 = arith.constant 0 : index
    %c0_4 = arith.constant 0 : index
    %3 = vector.load %arg3[%c0_3, %c0_4] : memref<1x128xf32, #tpu.memory_space<vmem>>, vector<1x128xf32>
    %4 = vector.broadcast %3 : vector<1x128xf32> to vector<16x128xf32>
    %5 = arith.addf %2, %4 : vector<16x128xf32>
    %cst_5 = arith.constant 0.000000e+00 : f32
    %6 = vector.broadcast %cst_5 : f32 to vector<16x128xf32>
    %7 = arith.maximumf %5, %6 : vector<16x128xf32>
    %c0_6 = arith.constant 0 : index
    %c0_7 = arith.constant 0 : index
    %8 = vector.load %arg4[%c0_6, %c0_7] : memref<128x128xf32, #tpu.memory_space<vmem>>, vector<128x128xf32>
    %cst_8 = arith.constant dense<0.000000e+00> : vector<16x128xf32>
    %9 = tpu.matmul %7, %8, %cst_8 {dimension_numbers = #tpu.dot_dimension_numbers<[1], [0], [0], [1], [0, 0, 1, 1], [], []>} : vector<16x128xf32>, vector<128x128xf32>, vector<16x128xf32> -> vector<16x128xf32>
    %c0_9 = arith.constant 0 : index
    %c0_10 = arith.constant 0 : index
    %10 = vector.load %arg5[%c0_9, %c0_10] : memref<1x128xf32, #tpu.memory_space<vmem>>, vector<1x128xf32>
    %11 = vector.broadcast %10 : vector<1x128xf32> to vector<16x128xf32>
    %12 = arith.addf %9, %11 : vector<16x128xf32>
    %cst_11 = arith.constant 0.000000e+00 : f32
    %13 = vector.broadcast %cst_11 : f32 to vector<16x128xf32>
    %14 = arith.maximumf %12, %13 : vector<16x128xf32>
    %c0_12 = arith.constant 0 : index
    %c0_13 = arith.constant 0 : index
    %15 = vector.load %arg6[%c0_12, %c0_13] : memref<128x128xf32, #tpu.memory_space<vmem>>, vector<128x128xf32>
    %cst_14 = arith.constant dense<0.000000e+00> : vector<16x128xf32>
    %16 = tpu.matmul %14, %15, %cst_14 {dimension_numbers = #tpu.dot_dimension_numbers<[1], [0], [0], [1], [0, 0, 1, 1], [], []>} : vector<16x128xf32>, vector<128x128xf32>, vector<16x128xf32> -> vector<16x128xf32>
    %c0_15 = arith.constant 0 : index
    %c0_16 = arith.constant 0 : index
    %17 = vector.load %arg7[%c0_15, %c0_16] : memref<1x128xf32, #tpu.memory_space<vmem>>, vector<1x128xf32>
    %18 = vector.broadcast %17 : vector<1x128xf32> to vector<16x128xf32>
    %19 = arith.addf %16, %18 : vector<16x128xf32>
    %20 = math.tanh %19 : vector<16x128xf32>
    %c0_17 = arith.constant 0 : index
    %c0_18 = arith.constant 0 : index
    %21 = vector.load %arg8[%c0_17, %c0_18] : memref<16x128xf32, #tpu.memory_space<vmem>>, vector<16x128xf32>
    tpu.vector_store %arg8[%c0_17, %c0_18], %20 {strides = array<i32>} : memref<16x128xf32, #tpu.memory_space<vmem>>, vector<16x128xf32>,
    return
  }
  func.func @transform_0(%arg0: i32) -> (i32, i32) {
    %c0_i32 = arith.constant 0 : i32
    %c0_i32_0 = arith.constant 0 : i32
    return %arg0, %c0_i32 : i32, i32
  }
  func.func @transform_1(%arg0: i32) -> (i32, i32) {
    %c0_i32 = arith.constant 0 : i32
    %c0_i32_0 = arith.constant 0 : i32
    %c0_i32_1 = arith.constant 0 : i32
    return %c0_i32, %c0_i32_0 : i32, i32
  }
  func.func @transform_2(%arg0: i32) -> (i32, i32) {
    %c0_i32 = arith.constant 0 : i32
    %c0_i32_0 = arith.constant 0 : i32
    %c0_i32_1 = arith.constant 0 : i32
    return %c0_i32, %c0_i32_0 : i32, i32
  }
  func.func @transform_3(%arg0: i32) -> (i32, i32) {
    %c0_i32 = arith.constant 0 : i32
    %c0_i32_0 = arith.constant 0 : i32
    %c0_i32_1 = arith.constant 0 : i32
    return %c0_i32, %c0_i32_0 : i32, i32
  }
  func.func @transform_4(%arg0: i32) -> (i32, i32) {
    %c0_i32 = arith.constant 0 : i32
    %c0_i32_0 = arith.constant 0 : i32
    %c0_i32_1 = arith.constant 0 : i32
    return %c0_i32, %c0_i32_0 : i32, i32
  }
  func.func @transform_5(%arg0: i32) -> (i32, i32) {
    %c0_i32 = arith.constant 0 : i32
    %c0_i32_0 = arith.constant 0 : i32
    %c0_i32_1 = arith.constant 0 : i32
    return %c0_i32, %c0_i32_0 : i32, i32
  }
  func.func @transform_6(%arg0: i32) -> (i32, i32) {
    %c0_i32 = arith.constant 0 : i32
    %c0_i32_0 = arith.constant 0 : i32
    %c0_i32_1 = arith.constant 0 : i32
    return %c0_i32, %c0_i32_0 : i32, i32
  }
  func.func @transform_7(%arg0: i32) -> (i32, i32) {
    %c0_i32 = arith.constant 0 : i32
    %c0_i32_0 = arith.constant 0 : i32
    return %arg0, %c0_i32 : i32, i32
  }
}

</mosaic_0001>

<llo_original>
// kernel: tpu_custom_call.1
$region0: #{tpu_custom_call.1}
  #allocation0 [shape = 'u32[]', space=smem, size = 0x4, offset = 0x4, fixed_abs, tag = 'smem constant byte address 0x4 - core index']
  #allocation1 [shape = 'u32[144,128]{1,0:T(1,128)}', space=vmem, size = 0x12000, scoped, tag = 'internal scratch']
  %s0 = inlined_call_operand.vmem [shape: f32[64,16], index: 0, kind: input, shape index: {}]
  %s1 = inlined_call_operand.vmem [shape: f32[16,128], index: 1, kind: input, shape index: {}]
  %s2 = inlined_call_operand.vmem [shape: f32[1,128], index: 2, kind: input, shape index: {}]
  %s3 = inlined_call_operand.hbm [shape: f32[128,128], index: 3, kind: input, shape index: {}]
  %s4 = inlined_call_operand.vmem [shape: f32[1,128], index: 4, kind: input, shape index: {}]
  %s5 = inlined_call_operand.hbm [shape: f32[128,128], index: 5, kind: input, shape index: {}]
  %s6 = inlined_call_operand.vmem [shape: f32[1,128], index: 6, kind: input, shape index: {}]
  %s7 = inlined_call_operand.hbm [shape: f32[64,128], index: 7, kind: output, shape index: {}]
  %s8 = sld [smem:[#allocation0]]
  $region69: #{tpu_custom_call.1} parent=0
    _
  %s10 = ssub.s32 1, %s8
  %s11 = scalar_select 0, %s10, %s8
  $region1: #{tpu_custom_call.1} parent=0
    #allocation2 [shape = 'u8[65536]{0}', space=vmem, size = 0x10000, scoped, tag = 'input window, operand 3, single buffered']
    #allocation3 [shape = 's32[2]{0}', space=sflag, size = 0x8, scoped, tag = 'scoped memory for tpu_custom_call.1']
    #allocation4 [shape = 's32[2]{0}', space=sflag, size = 0x8, scoped, tag = 'scoped memory for tpu_custom_call.1']
    #allocation5 [shape = 'u8[65536]{0}', space=vmem, size = 0x10000, scoped, tag = 'input window, operand 5, single buffered']
    #allocation6 [shape = 's32[1]{0}', space=sflag, size = 0x4, scoped, tag = 'scoped memory for tpu_custom_call.1']
    #allocation7 [shape = 'u8[16384]{0}', space=vmem, size = 0x4000, scoped, tag = 'output window, operand 0']
    %12 = vsyncpa [#allocation3], 0
    %13 = vsyncpa [#allocation6], 0
    %14 = vsyncpa [#allocation4], 0
    %s15 = scalar_lea.sflag [#allocation4], 1
    %16 = vsyncpa %s15, 0
    loop: start=0, step=1, limit=6
    $region2: #{tpu_custom_call.1} parent=1 // loop_pre_header
      _
    $region3: #{tpu_custom_call.1} parent=1 // loop_header
      %s18 = sphi 0, %s22
      %p19 = scmp.ge.s32.totalorder %s18, 6
      %s28 = sphi 0, %s30
      %s31 = sphi 0, %s28
      %s32 = sphi 0, %s31
      %s48 = sphi 0, %s32
      %s52 = sphi 0, %s52
      %s54 = sphi 0, %s52
      %s55 = sphi 0, %s54
      %s69 = sphi 0, %s55
      %s73 = sphi 0, %s73
      %s75 = sphi 0, %s73
      %s76 = sphi 0, %s75
      %s90 = sphi 0, %s76
      %s94 = sphi 0, %s94
      %s96 = sphi 0, %s94
      %s97 = sphi 0, %s96
      %s111 = sphi 0, %s97
      %s115 = sphi 0, %s115
      %s117 = sphi 0, %s115
      %s118 = sphi 0, %s117
      %s132 = sphi 0, %s118
      %s136 = sphi 0, %s136
      %s138 = sphi 0, %s136
      %s139 = sphi 0, %s138
      %s153 = sphi 0, %s139
      %s157 = sphi 0, %s157
      %s159 = sphi 0, %s157
      %s160 = sphi 0, %s159
      %s174 = sphi 0, %s160
      %s180 = sphi 0, %s182
      %s183 = sphi 0, %s180
      %s184 = sphi 0, %s183
      %s200 = sphi 0, %s184
    $region4: #{tpu_custom_call.1} parent=1 // loop_header_branch
      %21 = sbr.rel (%p19) target = $region8
    $region5: #{tpu_custom_call.1} parent=1 // loop_body
      %s23 = ssub.s32 %s18, 1
      %s24 = ssub.s32 %s18, 2
      %s25 = sadd.s32 %s18, 1
      %s26 = ssub.s32 %s18, %s25
      %p27 = scmp.eq.s32.totalorder %s26, 0
      %s29 = sadd.s32 %s28, 1
      %s30 = scalar_select %p27, %s28, %s29
      %p33 = pneg %p27
      %p34 = scmp.eq.s32.totalorder %s18, 3
      %p35 = por %p33, %p34
      %p36 = scmp.ne.s32.totalorder %s28, %s31
      %p37 = scmp.eq.s32.totalorder %s18, 0
      %p38 = por %p36, %p37
      %p39 = scmp.ne.s32.totalorder %s28, %s31
      %p40 = scmp.eq.s32.totalorder %s23, 3
      %p41 = por %p39, %p40
      %p42 = scmp.ne.s32.totalorder %s31, %s32
      %p43 = scmp.eq.s32.totalorder %s23, 0
      %p44 = por %p42, %p43
      %p45 = scmp.ne.s32.totalorder %s31, %s32
      %p46 = scmp.eq.s32.totalorder %s24, 3
      %p47 = por %p45, %p46
      %p49 = scmp.ne.s32.totalorder %s32, %s48
      %p50 = scmp.eq.s32.totalorder %s24, 0
      %p51 = por %p49, %p50
      %s53 = sadd.s32 %s52, 1
      %p56 = scmp.eq.s32.totalorder %s18, 3
      %p57 = scmp.ne.s32.totalorder %s52, %s54
      %p58 = scmp.eq.s32.totalorder %s18, 0
      %p59 = por %p57, %p58
      %p60 = scmp.ne.s32.totalorder %s52, %s54
      %p61 = scmp.eq.s32.totalorder %s23, 3
      %p62 = por %p60, %p61
      %p63 = scmp.ne.s32.totalorder %s54, %s55
      %p64 = scmp.eq.s32.totalorder %s23, 0
      %p65 = por %p63, %p64
      %p66 = scmp.ne.s32.totalorder %s54, %s55
      %p67 = scmp.eq.s32.totalorder %s24, 3
      %p68 = por %p66, %p67
      %p70 = scmp.ne.s32.totalorder %s55, %s69
      %p71 = scmp.eq.s32.totalorder %s24, 0
      %p72 = por %p70, %p71
      %s74 = sadd.s32 %s73, 1
      %p77 = scmp.eq.s32.totalorder %s18, 3
      %p78 = scmp.ne.s32.totalorder %s73, %s75
      %p79 = scmp.eq.s32.totalorder %s18, 0
      %p80 = por %p78, %p79
      %p81 = scmp.ne.s32.totalorder %s73, %s75
      %p82 = scmp.eq.s32.totalorder %s23, 3
      %p83 = por %p81, %p82
      %p84 = scmp.ne.s32.totalorder %s75, %s76
      %p85 = scmp.eq.s32.totalorder %s23, 0
      %p86 = por %p84, %p85
      %p87 = scmp.ne.s32.totalorder %s75, %s76
      %p88 = scmp.eq.s32.totalorder %s24, 3
      %p89 = por %p87, %p88
      %p91 = scmp.ne.s32.totalorder %s76, %s90
      %p92 = scmp.eq.s32.totalorder %s24, 0
      %p93 = por %p91, %p92
      %s95 = sadd.s32 %s94, 1
      %p98 = scmp.eq.s32.totalorder %s18, 3
      %p99 = scmp.ne.s32.totalorder %s94, %s96
      %p100 = scmp.eq.s32.totalorder %s18, 0
      %p101 = por %p99, %p100
      %p102 = scmp.ne.s32.totalorder %s94, %s96
      %p103 = scmp.eq.s32.totalorder %s23, 3
      %p104 = por %p102, %p103
      %p105 = scmp.ne.s32.totalorder %s96, %s97
      %p106 = scmp.eq.s32.totalorder %s23, 0
      %p107 = por %p105, %p106
      %p108 = scmp.ne.s32.totalorder %s96, %s97
      %p109 = scmp.eq.s32.totalorder %s24, 3
      %p110 = por %p108, %p109
      %p112 = scmp.ne.s32.totalorder %s97, %s111
      %p113 = scmp.eq.s32.totalorder %s24, 0
      %p114 = por %p112, %p113
      %s116 = sadd.s32 %s115, 1
      %p119 = scmp.eq.s32.totalorder %s18, 3
      %p120 = scmp.ne.s32.totalorder %s115, %s117
      %p121 = scmp.eq.s32.totalorder %s18, 0
      %p122 = por %p120, %p121
      %p123 = scmp.ne.s32.totalorder %s115, %s117
      %p124 = scmp.eq.s32.totalorder %s23, 3
      %p125 = por %p123, %p124
      %p126 = scmp.ne.s32.totalorder %s117, %s118
      %p127 = scmp.eq.s32.totalorder %s23, 0
      %p128 = por %p126, %p127
      %p129 = scmp.ne.s32.totalorder %s117, %s118
      %p130 = scmp.eq.s32.totalorder %s24, 3
      %p131 = por %p129, %p130
      %p133 = scmp.ne.s32.totalorder %s118, %s132
      %p134 = scmp.eq.s32.totalorder %s24, 0
      %p135 = por %p133, %p134
      %s137 = sadd.s32 %s136, 1
      %p140 = scmp.eq.s32.totalorder %s18, 3
      %p141 = scmp.ne.s32.totalorder %s136, %s138
      %p142 = scmp.eq.s32.totalorder %s18, 0
      %p143 = por %p141, %p142
      %p144 = scmp.ne.s32.totalorder %s136, %s138
      %p145 = scmp.eq.s32.totalorder %s23, 3
      %p146 = por %p144, %p145
      %p147 = scmp.ne.s32.totalorder %s138, %s139
      %p148 = scmp.eq.s32.totalorder %s23, 0
      %p149 = por %p147, %p148
      %p150 = scmp.ne.s32.totalorder %s138, %s139
      %p151 = scmp.eq.s32.totalorder %s24, 3
      %p152 = por %p150, %p151
      %p154 = scmp.ne.s32.totalorder %s139, %s153
      %p155 = scmp.eq.s32.totalorder %s24, 0
      %p156 = por %p154, %p155
      %s158 = sadd.s32 %s157, 1
      %p161 = scmp.eq.s32.totalorder %s18, 3
      %p162 = scmp.ne.s32.totalorder %s157, %s159
      %p163 = scmp.eq.s32.totalorder %s18, 0
      %p164 = por %p162, %p163
      %p165 = scmp.ne.s32.totalorder %s157, %s159
      %p166 = scmp.eq.s32.totalorder %s23, 3
      %p167 = por %p165, %p166
      %p168 = scmp.ne.s32.totalorder %s159, %s160
      %p169 = scmp.eq.s32.totalorder %s23, 0
      %p170 = por %p168, %p169
      %p171 = scmp.ne.s32.totalorder %s159, %s160
      %p172 = scmp.eq.s32.totalorder %s24, 3
      %p173 = por %p171, %p172
      %p175 = scmp.ne.s32.totalorder %s160, %s174
      %p176 = scmp.eq.s32.totalorder %s24, 0
      %p177 = por %p175, %p176
      %s178 = ssub.s32 %s18, %s25
      %p179 = scmp.eq.s32.totalorder %s178, 0
      %s181 = sadd.s32 %s180, 1
      %s182 = scalar_select %p179, %s180, %s181
      %p185 = pneg %p179
      %p186 = scmp.eq.s32.totalorder %s18, 3
      %p187 = por %p185, %p186
      %p188 = scmp.ne.s32.totalorder %s180, %s183
      %p189 = scmp.eq.s32.totalorder %s18, 0
      %p190 = por %p188, %p189
      %p191 = scmp.ne.s32.totalorder %s180, %s183
      %p192 = scmp.eq.s32.totalorder %s23, 3
      %p193 = por %p191, %p192
      %p194 = scmp.ne.s32.totalorder %s183, %s184
      %p195 = scmp.eq.s32.totalorder %s23, 0
      %p196 = por %p194, %p195
      %p197 = scmp.ne.s32.totalorder %s183, %s184
      %p198 = scmp.eq.s32.totalorder %s24, 3
      %p199 = por %p197, %p198
      %p201 = scmp.ne.s32.totalorder %s184, %s200
      %p202 = scmp.eq.s32.totalorder %s24, 0
      %p203 = por %p201, %p202
      %p204 = scmp.le.s32.totalorder 1, %s18
      %p205 = scmp.lt.s32.totalorder %s18, 5
      %p206 = pnand %p204, %p205
      %p207 = pneg %p206
      // Predicated region
      $region9: #{tpu_custom_call.1} parent=5 // pred_check
        _
      $region10: #{tpu_custom_call.1} parent=5 // pred_check_branch
        %209 = sbr.rel (%p206) target = $region12
      $region11: #{tpu_custom_call.1} parent=5 // pred_region
        %s210 = ssub.s32 %s18, 1
        // Predicated region
        $region13: #{tpu_custom_call.1} parent=11 // pred_check
          %p211 = pneg %p65
        $region14: #{tpu_custom_call.1} parent=11 // pred_check_branch
          %213 = sbr.rel (%p211) target = $region16
        $region15: #{tpu_custom_call.1} parent=11 // pred_region
          _
        $region16: #{tpu_custom_call.1} parent=11 // pred_fallthru
          _
        // Predicated region
        $region17: #{tpu_custom_call.1} parent=11 // pred_check
          %p214 = pneg %p86
        $region18: #{tpu_custom_call.1} parent=11 // pred_check_branch
          %216 = sbr.rel (%p214) target = $region20
        $region19: #{tpu_custom_call.1} parent=11 // pred_region
          _
        $region20: #{tpu_custom_call.1} parent=11 // pred_fallthru
          _
        // Predicated region
        $region21: #{tpu_custom_call.1} parent=11 // pred_check
          %p217 = pneg %p107
        $region22: #{tpu_custom_call.1} parent=11 // pred_check_branch
          %219 = sbr.rel (%p217) target = $region24
        $region23: #{tpu_custom_call.1} parent=11 // pred_region
          %s221 = ssub.s32 2048, 2048
          %222 = vsyncadd [#allocation3], %s221
          %s223 = sshll.u32 [#allocation2], 4
          %s224 = int_to_ptr.vmem [resolvable:$true] %s223
          %229 = dma.hbm_to_vmem [thread:$0]  %s3, 2048, %s224, [#allocation3], 128, 128, 8
        $region24: #{tpu_custom_call.1} parent=11 // pred_fallthru
          _
        // Predicated region
        $region25: #{tpu_custom_call.1} parent=11 // pred_check
          %p230 = pneg %p128
        $region26: #{tpu_custom_call.1} parent=11 // pred_check_branch
          %232 = sbr.rel (%p230) target = $region28
        $region27: #{tpu_custom_call.1} parent=11 // pred_region
          _
        $region28: #{tpu_custom_call.1} parent=11 // pred_fallthru
          _
        // Predicated region
        $region29: #{tpu_custom_call.1} parent=11 // pred_check
          %p233 = pneg %p149
        $region30: #{tpu_custom_call.1} parent=11 // pred_check_branch
          %235 = sbr.rel (%p233) target = $region32
        $region31: #{tpu_custom_call.1} parent=11 // pred_region
          %s237 = ssub.s32 2048, 2048
          %238 = vsyncadd [#allocation6], %s237
          %s239 = sshll.u32 [#allocation5], 4
          %s240 = int_to_ptr.vmem [resolvable:$true] %s239
          %245 = dma.hbm_to_vmem [thread:$0]  %s5, 2048, %s240, [#allocation6], 128, 128, 8
        $region32: #{tpu_custom_call.1} parent=11 // pred_fallthru
          _
        // Predicated region
        $region33: #{tpu_custom_call.1} parent=11 // pred_check
          %p246 = pneg %p170
        $region34: #{tpu_custom_call.1} parent=11 // pred_check_branch
          %248 = sbr.rel (%p246) target = $region36
        $region35: #{tpu_custom_call.1} parent=11 // pred_region
          _
        $region36: #{tpu_custom_call.1} parent=11 // pred_fallthru
          _
      $region12: #{tpu_custom_call.1} parent=5 // pred_fallthru
        _
      %p249 = scmp.lt.s32.totalorder %s18, 4
      // Predicated region
      $region37: #{tpu_custom_call.1} parent=5 // pred_check
        %p250 = pneg %p249
      $region38: #{tpu_custom_call.1} parent=5 // pred_check_branch
        %252 = sbr.rel (%p250) target = $region40
      $region39: #{tpu_custom_call.1} parent=5 // pred_region
        // Predicated region
        $region41: #{tpu_custom_call.1} parent=39 // pred_check
          %p253 = pneg %p38
        $region42: #{tpu_custom_call.1} parent=39 // pred_check_branch
          %255 = sbr.rel (%p253) target = $region44
        $region43: #{tpu_custom_call.1} parent=39 // pred_region
          %s256 = smul.u32 2, %s18
          %p257 = scmp.lt.s32.totalorder %s256, 7
          %s258 = scalar_select %p257, %s256, 7
          %s259 = smul.addr %s258, 8
          %s260 = scalar_lea.vmem %s0, %s259
          %s261 = smul.u32 2, %s18
        $region44: #{tpu_custom_call.1} parent=39 // pred_fallthru
          _
      $region40: #{tpu_custom_call.1} parent=5 // pred_fallthru
        _
      %p262 = scmp.le.s32.totalorder 1, %s18
      %p263 = scmp.lt.s32.totalorder %s18, 5
      %p264 = pnand %p262, %p263
      %p265 = pneg %p264
      // Predicated region
      $region45: #{tpu_custom_call.1} parent=5 // pred_check
        _
      $region46: #{tpu_custom_call.1} parent=5 // pred_check_branch
        %267 = sbr.rel (%p264) target = $region48
      $region47: #{tpu_custom_call.1} parent=5 // pred_region
        %s268 = ssub.s32 %s18, 1
        // Predicated region
        $region49: #{tpu_custom_call.1} parent=47 // pred_check
          %p269 = pneg %p107
        $region50: #{tpu_custom_call.1} parent=47 // pred_check_branch
          %271 = sbr.rel (%p269) target = $region52
        $region51: #{tpu_custom_call.1} parent=47 // pred_region
          %272 = dma.done [#allocation3], 2048
        $region52: #{tpu_custom_call.1} parent=47 // pred_fallthru
          _
        // Predicated region
        $region53: #{tpu_custom_call.1} parent=47 // pred_check
          %p273 = pneg %p149
        $region54: #{tpu_custom_call.1} parent=47 // pred_check_branch
          %275 = sbr.rel (%p273) target = $region56
        $region55: #{tpu_custom_call.1} parent=47 // pred_region
          %276 = dma.done [#allocation6], 2048
        $region56: #{tpu_custom_call.1} parent=47 // pred_fallthru
          _
        %s277 = smul.u32 2, %s23
        %p278 = scmp.lt.s32.totalorder %s277, 7
        %s279 = scalar_select %p278, %s277, 7
        %s280 = smul.addr %s279, 8
        %s281 = scalar_lea.vmem %s0, %s280
        %p282 = pneg %p44
        %p283 = pneg %p41
        %p284 = pneg %p65
        %p285 = pneg %p62
        %p286 = pneg %p86
        %p287 = pneg %p83
        %p288 = pneg %p107
        %p289 = pneg %p104
        %p290 = pneg %p128
        %p291 = pneg %p125
        %p292 = pneg %p149
        %p293 = pneg %p146
        %p294 = pneg %p170
        %p295 = pneg %p167
        %p296 = pneg %p196
        %p297 = pneg %p193
        %s298 = sand.u32 %s183, 1
        %s299 = scalar_lea.sflag [#allocation4], %s298
        %s300 = sand.u32 %s183, 1
        %s301 = smul.addr %s300, 16
        %s302 = scalar_lea.vmem [#allocation7], %s301
        %s303 = smul.u32 2, %s23
        %p304 = scmp.lt.s32.totalorder %s303, 7
        %s305 = scalar_select %p304, %s303, 7
        %s306 = smul.addr %s305, 8
        %s307 = scalar_lea.vmem %s0, %s306
        %s308 = smul.u32 2, %s23
        %s309 = smul.u32 2, %s23
        %v310 = vld [vmem:[%s307] sm:$0xff]
        %v311 = vld [vmem:[%s307 + $0x8] sm:$0xff]
        %v312 = vld [vmem:[%s1] sm:$0xff]
        %v313 = vld [vmem:[%s1 + $0x8] sm:$0xff]
        %v314 = vld [vmem:[%s2] sm:$0x1]
        %v316 = vlaneseq
        %v317 = vshrl.u32 %v316, 7
        %v318 = vsub.s32 0, %v317
        %v319 = vrot.slane %v314, %v318
        %vm321 = vcmask 130048
        %v323 = vsel %vm321, %v310, 0
        %v326 = vsel %vm321, %v311, 0
        %328 = vmatprep.subr.mxu0 0.0
        %329 = vmatpush1.msra.mxu0 %v312
        %330 = vmatprep.subr.mxu0 0.0
        %331 = vmatpush1.msra.mxu0 %v313
        %332 = vmatprep.subr.mxu0 0.0
        %333 = vmatpush1.msra.mxu0 0.0
        %334 = vmatprep.subr.mxu0 0.0
        %335 = vmatpush1.msra.mxu0 0.0
        %336 = vmatprep.subr.mxu0 0.0
        %337 = vmatpush1.msra.mxu0 0.0
        %338 = vmatprep.subr.mxu0 0.0
        %339 = vmatpush1.msra.mxu0 0.0
        %340 = vmatprep.subr.mxu0 0.0
        %341 = vmatpush1.msra.mxu0 0.0
        %342 = vmatprep.subr.mxu0 0.0
        %343 = vmatpush1.msra.mxu0 0.0
        %344 = vmatprep.subr.mxu0 0.0
        %345 = vmatpush1.msra.mxu0 0.0
        %346 = vmatprep.subr.mxu0 0.0
        %347 = vmatpush1.msra.mxu0 0.0
        %348 = vmatprep.subr.mxu0 0.0
        %349 = vmatpush1.msra.mxu0 0.0
        %350 = vmatprep.subr.mxu0 0.0
        %351 = vmatpush1.msra.mxu0 0.0
        %352 = vmatprep.subr.mxu0 0.0
        %353 = vmatpush1.msra.mxu0 0.0
        %354 = vmatprep.subr.mxu0 0.0
        %355 = vmatpush1.msra.mxu0 0.0
        %356 = vmatprep.subr.mxu0 0.0
        %357 = vmatpush1.msra.mxu0 0.0
        %358 = vmatprep.subr.mxu0 0.0
        %359 = vmatpush1.msra.mxu0 0.0
        %360 = vmatprep.subr.mxu0 0.0
        %361 = vmatpush1.msra.mxu0 0.0
        %362 = vmatprep.subr.mxu0 0.0
        %363 = vmatpush1.msra.mxu0 0.0
        %364 = vmatprep.subr.mxu0 0.0
        %365 = vmatpush1.msra.mxu0 0.0
        %366 = vmatprep.subr.mxu0 0.0
        %367 = vmatpush1.msra.mxu0 0.0
        %368 = vmatprep.subr.mxu0 0.0
        %369 = vmatpush1.msra.mxu0 0.0
        %370 = vmatprep.subr.mxu0 0.0
        %371 = vmatpush1.msra.mxu0 0.0
        %372 = vmatprep.subr.mxu0 0.0
        %373 = vmatpush1.msra.mxu0 0.0
        %374 = vmatprep.subr.mxu0 0.0
        %375 = vmatpush1.msra.mxu0 0.0
        %376 = vmatprep.subr.mxu0 0.0
        %377 = vmatpush1.msra.mxu0 0.0
        %378 = vmatprep.subr.mxu0 0.0
        %379 = vmatpush1.msra.mxu0 0.0
        %380 = vmatprep.subr.mxu0 0.0
        %381 = vmatpush1.msra.mxu0 0.0
        %382 = vmatprep.subr.mxu0 0.0
        %383 = vmatpush1.msra.mxu0 0.0
        %384 = vmatprep.subr.mxu0 0.0
        %385 = vmatpush1.msra.mxu0 0.0
        %386 = vmatprep.subr.mxu0 0.0
        %387 = vmatpush1.msra.mxu0 0.0
        %388 = vmatprep.subr.mxu0 0.0
        %389 = vmatpush1.msra.mxu0 0.0
        %390 = vmatprep.subr.mxu0 0.0
        %391 = vmatpush1.msra.mxu0 0.0
        %392 = vmatprep.mubr.f32.mxu0 0.0
        %393 = vmatmul.mubr.f32.gmra.mrb[0].mxu0 %v323
        %v394 = vpop.f32.mrb[0].mxu0
        %v395 = vadd.f32 %v319, %v394
        %v396 = vpop.f32.mrb[0].mxu0
        %397 = vmatprep.mubr.f32.mxu0 0.0
        %398 = vmatmul.mubr.f32.gmra.mrb[0].mxu0 %v326
        %v399 = vpop.f32.mrb[0].mxu0
        %v400 = vadd.f32 %v319, %v399
        %v401 = vpop.f32.mrb[0].mxu0
        %402 = vdwg.mxu0
        %v403 = vmax.f32 %v395, 0.0
        %v404 = vmax.f32 %v400, 0.0
        %v405 = vld [vmem:[#allocation2] sm:$0xff]
        %v406 = vld [vmem:[#allocation2 + $0x8] sm:$0xff]
        %v407 = vld [vmem:[#allocation2 + $0x10] sm:$0xff]
        %v408 = vld [vmem:[#allocation2 + $0x18] sm:$0xff]
        %v409 = vld [vmem:[#allocation2 + $0x20] sm:$0xff]
        %v410 = vld [vmem:[#allocation2 + $0x28] sm:$0xff]
        %v411 = vld [vmem:[#allocation2 + $0x30] sm:$0xff]
        %v412 = vld [vmem:[#allocation2 + $0x38] sm:$0xff]
        %v413 = vld [vmem:[#allocation2 + $0x40] sm:$0xff]
        %v414 = vld [vmem:[#allocation2 + $0x48] sm:$0xff]
        %v415 = vld [vmem:[#allocation2 + $0x50] sm:$0xff]
        %v416 = vld [vmem:[#allocation2 + $0x58] sm:$0xff]
        %v417 = vld [vmem:[#allocation2 + $0x60] sm:$0xff]
        %v418 = vld [vmem:[#allocation2 + $0x68] sm:$0xff]
        %v419 = vld [vmem:[#allocation2 + $0x70] sm:$0xff]
        %v420 = vld [vmem:[#allocation2 + $0x78] sm:$0xff]
        %v421 = vld [vmem:[%s4] sm:$0x1]
        %v423 = vlaneseq
        %v424 = vshrl.u32 %v423, 7
        %v425 = vsub.s32 0, %v424
        %v426 = vrot.slane %v421, %v425
        %428 = vmatprep.subr.mxu0 0.0
        %429 = vmatpush1.msra.mxu0 %v405
        %430 = vmatprep.subr.mxu0 0.0
        %431 = vmatpush1.msra.mxu0 %v406
        %432 = vmatprep.subr.mxu0 0.0
        %433 = vmatpush1.msra.mxu0 %v407
        %434 = vmatprep.subr.mxu0 0.0
        %435 = vmatpush1.msra.mxu0 %v408
        %436 = vmatprep.subr.mxu0 0.0
        %437 = vmatpush1.msra.mxu0 %v409
        %438 = vmatprep.subr.mxu0 0.0
        %439 = vmatpush1.msra.mxu0 %v410
        %440 = vmatprep.subr.mxu0 0.0
        %441 = vmatpush1.msra.mxu0 %v411
        %442 = vmatprep.subr.mxu0 0.0
        %443 = vmatpush1.msra.mxu0 %v412
        %444 = vmatprep.subr.mxu0 0.0
        %445 = vmatpush1.msra.mxu0 %v413
        %446 = vmatprep.subr.mxu0 0.0
        %447 = vmatpush1.msra.mxu0 %v414
        %448 = vmatprep.subr.mxu0 0.0
        %449 = vmatpush1.msra.mxu0 %v415
        %450 = vmatprep.subr.mxu0 0.0
        %451 = vmatpush1.msra.mxu0 %v416
        %452 = vmatprep.subr.mxu0 0.0
        %453 = vmatpush1.msra.mxu0 %v417
        %454 = vmatprep.subr.mxu0 0.0
        %455 = vmatpush1.msra.mxu0 %v418
        %456 = vmatprep.subr.mxu0 0.0
        %457 = vmatpush1.msra.mxu0 %v419
        %458 = vmatprep.subr.mxu0 0.0
        %459 = vmatpush1.msra.mxu0 %v420
        %460 = vmatprep.subr.mxu0 0.0
        %461 = vmatpush1.msra.mxu0 0.0
        %462 = vmatprep.subr.mxu0 0.0
        %463 = vmatpush1.msra.mxu0 0.0
        %464 = vmatprep.subr.mxu0 0.0
        %465 = vmatpush1.msra.mxu0 0.0
        %466 = vmatprep.subr.mxu0 0.0
        %467 = vmatpush1.msra.mxu0 0.0
        %468 = vmatprep.subr.mxu0 0.0
        %469 = vmatpush1.msra.mxu0 0.0
        %470 = vmatprep.subr.mxu0 0.0
        %471 = vmatpush1.msra.mxu0 0.0
        %472 = vmatprep.subr.mxu0 0.0
        %473 = vmatpush1.msra.mxu0 0.0
        %474 = vmatprep.subr.mxu0 0.0
        %475 = vmatpush1.msra.mxu0 0.0
        %476 = vmatprep.subr.mxu0 0.0
        %477 = vmatpush1.msra.mxu0 0.0
        %478 = vmatprep.subr.mxu0 0.0
        %479 = vmatpush1.msra.mxu0 0.0
        %480 = vmatprep.subr.mxu0 0.0
        %481 = vmatpush1.msra.mxu0 0.0
        %482 = vmatprep.subr.mxu0 0.0
        %483 = vmatpush1.msra.mxu0 0.0
        %484 = vmatprep.subr.mxu0 0.0
        %485 = vmatpush1.msra.mxu0 0.0
        %486 = vmatprep.subr.mxu0 0.0
        %487 = vmatpush1.msra.mxu0 0.0
        %488 = vmatprep.subr.mxu0 0.0
        %489 = vmatpush1.msra.mxu0 0.0
        %490 = vmatprep.subr.mxu0 0.0
        %491 = vmatpush1.msra.mxu0 0.0
        %492 = vmatprep.mubr.f32.mxu0 0.0
        %493 = vmatmul.mubr.f32.gmra.mrb[0].mxu0 %v403
        %v494 = vpop.f32.mrb[0].mxu0
        %v495 = vadd.f32 %v426, %v494
        %v496 = vpop.f32.mrb[0].mxu0
        %497 = vmatprep.mubr.f32.mxu0 0.0
        %498 = vmatmul.mubr.f32.gmra.mrb[0].mxu0 %v404
        %v499 = vpop.f32.mrb[0].mxu0
        %v500 = vadd.f32 %v426, %v499
        %v501 = vpop.f32.mrb[0].mxu0
        %502 = vdwg.mxu0
        %v503 = vmax.f32 %v495, 0.0
        %v504 = vmax.f32 %v500, 0.0
        %v505 = vld [vmem:[#allocation5] sm:$0xff]
        %v506 = vld [vmem:[#allocation5 + $0x8] sm:$0xff]
        %v507 = vld [vmem:[#allocation5 + $0x10] sm:$0xff]
        %v508 = vld [vmem:[#allocation5 + $0x18] sm:$0xff]
        %v509 = vld [vmem:[#allocation5 + $0x20] sm:$0xff]
        %v510 = vld [vmem:[#allocation5 + $0x28] sm:$0xff]
        %v511 = vld [vmem:[#allocation5 + $0x30] sm:$0xff]
        %v512 = vld [vmem:[#allocation5 + $0x38] sm:$0xff]
        %v513 = vld [vmem:[#allocation5 + $0x40] sm:$0xff]
        %v514 = vld [vmem:[#allocation5 + $0x48] sm:$0xff]
        %v515 = vld [vmem:[#allocation5 + $0x50] sm:$0xff]
        %v516 = vld [vmem:[#allocation5 + $0x58] sm:$0xff]
        %v517 = vld [vmem:[#allocation5 + $0x60] sm:$0xff]
        %v518 = vld [vmem:[#allocation5 + $0x68] sm:$0xff]
        %v519 = vld [vmem:[#allocation5 + $0x70] sm:$0xff]
        %v520 = vld [vmem:[#allocation5 + $0x78] sm:$0xff]
        %v521 = vld [vmem:[%s6] sm:$0x1]
        %v523 = vlaneseq
        %v524 = vshrl.u32 %v523, 7
        %v525 = vsub.s32 0, %v524
        %v526 = vrot.slane %v521, %v525
        %528 = vmatprep.subr.mxu0 0.0
        %529 = vmatpush1.msra.mxu0 %v505
        %530 = vmatprep.subr.mxu0 0.0
        %531 = vmatpush1.msra.mxu0 %v506
        %532 = vmatprep.subr.mxu0 0.0
        %533 = vmatpush1.msra.mxu0 %v507
        %534 = vmatprep.subr.mxu0 0.0
        %535 = vmatpush1.msra.mxu0 %v508
        %536 = vmatprep.subr.mxu0 0.0
        %537 = vmatpush1.msra.mxu0 %v509
        %538 = vmatprep.subr.mxu0 0.0
        %539 = vmatpush1.msra.mxu0 %v510
        %540 = vmatprep.subr.mxu0 0.0
        %541 = vmatpush1.msra.mxu0 %v511
        %542 = vmatprep.subr.mxu0 0.0
        %543 = vmatpush1.msra.mxu0 %v512
        %544 = vmatprep.subr.mxu0 0.0
        %545 = vmatpush1.msra.mxu0 %v513
        %546 = vmatprep.subr.mxu0 0.0
        %547 = vmatpush1.msra.mxu0 %v514
        %548 = vmatprep.subr.mxu0 0.0
        %549 = vmatpush1.msra.mxu0 %v515
        %550 = vmatprep.subr.mxu0 0.0
        %551 = vmatpush1.msra.mxu0 %v516
        %552 = vmatprep.subr.mxu0 0.0
        %553 = vmatpush1.msra.mxu0 %v517
        %554 = vmatprep.subr.mxu0 0.0
        %555 = vmatpush1.msra.mxu0 %v518
        %556 = vmatprep.subr.mxu0 0.0
        %557 = vmatpush1.msra.mxu0 %v519
        %558 = vmatprep.subr.mxu0 0.0
        %559 = vmatpush1.msra.mxu0 %v520
        %560 = vmatprep.subr.mxu0 0.0
        %561 = vmatpush1.msra.mxu0 0.0
        %562 = vmatprep.subr.mxu0 0.0
        %563 = vmatpush1.msra.mxu0 0.0
        %564 = vmatprep.subr.mxu0 0.0
        %565 = vmatpush1.msra.mxu0 0.0
        %566 = vmatprep.subr.mxu0 0.0
        %567 = vmatpush1.msra.mxu0 0.0
        %568 = vmatprep.subr.mxu0 0.0
        %569 = vmatpush1.msra.mxu0 0.0
        %570 = vmatprep.subr.mxu0 0.0
        %571 = vmatpush1.msra.mxu0 0.0
        %572 = vmatprep.subr.mxu0 0.0
        %573 = vmatpush1.msra.mxu0 0.0
        %574 = vmatprep.subr.mxu0 0.0
        %575 = vmatpush1.msra.mxu0 0.0
        %576 = vmatprep.subr.mxu0 0.0
        %577 = vmatpush1.msra.mxu0 0.0
        %578 = vmatprep.subr.mxu0 0.0
        %579 = vmatpush1.msra.mxu0 0.0
        %580 = vmatprep.subr.mxu0 0.0
        %581 = vmatpush1.msra.mxu0 0.0
        %582 = vmatprep.subr.mxu0 0.0
        %583 = vmatpush1.msra.mxu0 0.0
        %584 = vmatprep.subr.mxu0 0.0
        %585 = vmatpush1.msra.mxu0 0.0
        %586 = vmatprep.subr.mxu0 0.0
        %587 = vmatpush1.msra.mxu0 0.0
        %588 = vmatprep.subr.mxu0 0.0
        %589 = vmatpush1.msra.mxu0 0.0
        %590 = vmatprep.subr.mxu0 0.0
        %591 = vmatpush1.msra.mxu0 0.0
        %592 = vmatprep.mubr.f32.mxu0 0.0
        %593 = vmatmul.mubr.f32.gmra.mrb[0].mxu0 %v503
        %v594 = vpop.f32.mrb[0].mxu0
        %v595 = vadd.f32 %v526, %v594
        %v596 = vpop.f32.mrb[0].mxu0
        %597 = vmatprep.mubr.f32.mxu0 0.0
        %598 = vmatmul.mubr.f32.gmra.mrb[0].mxu0 %v504
        %v599 = vpop.f32.mrb[0].mxu0
        %v600 = vadd.f32 %v526, %v599
        %v601 = vpop.f32.mrb[0].mxu0
        %602 = vdwg.mxu0
        %v603 = vtanh.pop %v595
        %v604 = vtanh.pop %v600
        %605 = vst [vmem:[%s302] sm:$0xff] %v603
        %606 = vst [vmem:[%s302 + $0x8] sm:$0xff] %v604
        %s607 = sand.u32 %s183, 1
        %s608 = scalar_lea.sflag [#allocation4], %s607
        %s609 = sand.u32 %s183, 1
        %s610 = smul.addr %s609, 16
        %s611 = scalar_lea.vmem [#allocation7], %s610
        // Predicated region
        $region57: #{tpu_custom_call.1} parent=47 // pred_check
          %p612 = pneg %p193
        $region58: #{tpu_custom_call.1} parent=47 // pred_check_branch
          %614 = sbr.rel (%p612) target = $region60
        $region59: #{tpu_custom_call.1} parent=47 // pred_region
          %s615 = smul.u32 2, %s23
          %s617 = ssub.s32 256, 256
          %618 = vsyncadd %s608, %s617
          %s619 = smul.addr %s615, 128
          %s620 = scalar_lea.hbm %s7, %s619
          %s621 = sshll.u32 %s611, 4
          %s622 = int_to_ptr.vmem [resolvable:$true] %s621
          %627 = dma.vmem_to_hbm [thread:$0]  %s622, 256, %s620, %s608, 128, 128, 8
        $region60: #{tpu_custom_call.1} parent=47 // pred_fallthru
          _
      $region48: #{tpu_custom_call.1} parent=5 // pred_fallthru
        _
      %p628 = scmp.le.s32.totalorder 2, %s18
      // Predicated region
      $region61: #{tpu_custom_call.1} parent=5 // pred_check
        %p629 = pneg %p628
      $region62: #{tpu_custom_call.1} parent=5 // pred_check_branch
        %631 = sbr.rel (%p629) target = $region64
      $region63: #{tpu_custom_call.1} parent=5 // pred_region
        %s632 = ssub.s32 %s18, 2
        // Predicated region
        $region65: #{tpu_custom_call.1} parent=63 // pred_check
          %p633 = pneg %p199
        $region66: #{tpu_custom_call.1} parent=63 // pred_check_branch
          %635 = sbr.rel (%p633) target = $region68
        $region67: #{tpu_custom_call.1} parent=63 // pred_region
          %s636 = sand.u32 %s184, 1
          %s637 = scalar_lea.sflag [#allocation4], %s636
          %s638 = sand.u32 %s184, 1
          %s639 = smul.addr %s638, 16
          %s640 = scalar_lea.vmem [#allocation7], %s639
          %641 = dma.done %s637, 256
        $region68: #{tpu_custom_call.1} parent=63 // pred_fallthru
          _
      $region64: #{tpu_custom_call.1} parent=5 // pred_fallthru
        _
    $region6: #{tpu_custom_call.1} parent=1 // loop_footer
      %s22 = sadd.s32 1, %s18
    $region7: #{tpu_custom_call.1} parent=1 // loop_footer_branch
      %17 = sbr.rel target = $region3
    $region8: #{tpu_custom_call.1} parent=1 // loop_exit
      _
    %642 = vsyncpa [#allocation3], 1
    %s643 = scalar_lea.sflag [#allocation3], 1
    %644 = vsyncpa %s643, 1
    %645 = vsyncpa [#allocation6], 1
    %646 = vsyncpa [#allocation4], 1
    %s647 = scalar_lea.sflag [#allocation4], 1
    %648 = vsyncpa %s647, 1

</llo_original>
